<compile_context>
chip_gen: v7x
topology: tpu7x:2x2x1
jax: 0.10.0
libtpu: 0.0.40
codegen_flags: <defaults>
</compile_context>

<pallas_src>
import jax
import jax.numpy as jnp
from jax.experimental import pallas as pl
from jax.experimental.pallas import tpu as pltpu

NUM_LAYERS = 3
N_FEATURES = 1


def decoder_kernel(xs_ref, h0_ref, c0_ref,
                   wih0_ref, whh0_ref, wih12_ref, whh12_ref, b_ref,
                   wout_ref, bout_ref,
                   y_ref, hn_ref, cn_ref,
                   h2hist_ref):
    H = hn_ref.shape[1]
    T = y_ref.shape[0]

    # Post-tanh scale/offset per gate column, built ONCE per launch.
    # Gate order along lanes: [i, f, g, o].  The matching 0.5 pre-tanh scale for
    # the sigmoid gates (i/f/o) is folded into the packed weights/biases, so a
    # single full-vreg tanh covers all four gates:
    #   sigmoid(x) = 0.5 * tanh(0.5 * x) + 0.5
    lane = jax.lax.broadcasted_iota(jnp.int32, (1, 4 * H), 1)
    is_g = jnp.logical_and(lane >= 2 * H, lane < 3 * H)
    alpha = jnp.where(is_g, 1.0, 0.5).astype(jnp.float32)
    beta = jnp.where(is_g, 0.0, 0.5).astype(jnp.float32)

    # Load weights / biases once; resident for all T steps.
    wih0 = wih0_ref[...]                                   # (1, 4H), pre-scaled
    whh0 = whh0_ref[...]                                   # (H, 4H), pre-scaled
    wih = [wih12_ref[l] for l in range(NUM_LAYERS - 1)]    # (H, 4H) each
    whh = [whh12_ref[l] for l in range(NUM_LAYERS - 1)]    # (H, 4H) each
    b = [b_ref[l:l + 1, :] for l in range(NUM_LAYERS)]     # (1, 4H) each
    wout = wout_ref[...]                                   # (1, H)
    bout = bout_ref[0]                                     # scalar, loop-invariant

    # Incoming state -> registers (carried as values across the unrolled loop).
    h = [h0_ref[l:l + 1, :] for l in range(NUM_LAYERS)]
    c = [c0_ref[l:l + 1, :] for l in range(NUM_LAYERS)]

    def lstm_cell(gates, c_prev):
        act = alpha * jnp.tanh(gates) + beta               # one EUP tanh, all gates
        i = act[:, 0 * H:1 * H]
        f = act[:, 1 * H:2 * H]
        g = act[:, 2 * H:3 * H]
        o = act[:, 3 * H:4 * H]
        c_new = f * c_prev + i * g
        h_new = o * jnp.tanh(c_new)
        return h_new, c_new

    # Fully-unrolled in-kernel time loop (T is static): single grid step, no
    # per-step pipeline machinery, static indices everywhere.
    for t in range(T):
        x = xs_ref[t]                                      # scalar from SMEM

        # Layer 0: input_size == 1 -> scalar * row instead of a K=1 matmul.
        g0 = (x * wih0
              + jnp.dot(h[0], whh0, preferred_element_type=jnp.float32)
              + b[0])
        h[0], c[0] = lstm_cell(g0, c[0])

        # Layers 1..2: two independent (1,H)x(H,4H) dots (no concat on the
        # recurrence chain; the two dots can overlap).
        for l in range(1, NUM_LAYERS):
            gl = (jnp.dot(h[l - 1], wih[l - 1], preferred_element_type=jnp.float32)
                  + jnp.dot(h[l], whh[l - 1], preferred_element_type=jnp.float32)
                  + b[l])
            h[l], c[l] = lstm_cell(gl, c[l])

        # Record top-layer hidden; the output head is computed after the loop.
        h2hist_ref[t:t + 1, :] = h[NUM_LAYERS - 1]

    # Output head for all T steps at once: VPU multiply + one cross-lane reduce,
    # stored in a single write (no per-step masked stores).
    y_ref[...] = jnp.sum(h2hist_ref[...] * wout, axis=-1, keepdims=True) + bout

    # Final h_n / c_n written once.
    for l in range(NUM_LAYERS):
        hn_ref[l:l + 1, :] = h[l]
        cn_ref[l:l + 1, :] = c[l]


@jax.jit
def _decoder_pallas(xs, h0, c0, wih0, whh0, wih12, whh12, b, wout, bout):
    T = xs.shape[0]
    H = h0.shape[-1]
    vmem = pl.BlockSpec(memory_space=pltpu.MemorySpace.VMEM)
    smem = pl.BlockSpec(memory_space=pltpu.MemorySpace.SMEM)
    return pl.pallas_call(
        decoder_kernel,
        in_specs=[
            smem,   # xs   (T,)            scalars
            vmem,   # h0   (L, H)
            vmem,   # c0   (L, H)
            vmem,   # wih0 (1, 4H)         pre-scaled
            vmem,   # whh0 (H, 4H)         pre-scaled
            vmem,   # wih12 (L-1, H, 4H)   pre-scaled
            vmem,   # whh12 (L-1, H, 4H)   pre-scaled
            vmem,   # b    (L, 4H)         fused + pre-scaled
            vmem,   # wout (1, H)
            smem,   # bout (1,)
        ],
        out_specs=(vmem, vmem, vmem),
        out_shape=(
            jax.ShapeDtypeStruct((T, 1), jnp.float32),            # y (all steps)
            jax.ShapeDtypeStruct((NUM_LAYERS, H), jnp.float32),   # h_n
            jax.ShapeDtypeStruct((NUM_LAYERS, H), jnp.float32),   # c_n
        ),
        scratch_shapes=[pltpu.VMEM((T, H), jnp.float32)],         # top-layer h history
    )(xs, h0, c0, wih0, whh0, wih12, whh12, b, wout, bout)


def decoder_step_seq(xs, input_hidden, input_cell, params):
    """Run T sequential Decoder.forward steps inside ONE kernel launch."""
    wih0, whh0, wih12, whh12, b, wout, bout = params
    H = input_hidden.shape[-1]
    xs1 = jnp.asarray(xs, jnp.float32).reshape(-1)                  # (T,)
    h0 = jnp.asarray(input_hidden, jnp.float32).reshape(NUM_LAYERS, H)
    c0 = jnp.asarray(input_cell, jnp.float32).reshape(NUM_LAYERS, H)
    ys, hn, cn = _decoder_pallas(xs1, h0, c0, wih0, whh0, wih12, whh12, b, wout, bout)
    return (ys.reshape(-1, 1, 1, N_FEATURES),
            hn.reshape(NUM_LAYERS, 1, H),
            cn.reshape(NUM_LAYERS, 1, H))


def decoder_forward(x, input_hidden, input_cell, params):
    """Exactly the module's forward: one LSTM step through 3 layers + Linear."""
    ys, hn, cn = decoder_step_seq(jnp.asarray(x, jnp.float32).reshape(1),
                                  input_hidden, input_cell, params)
    return ys[0], hn, cn            # y: (1, 1, 1)


def init_raw_params(key, hidden):
    """Deterministic params matching PyTorch's nn.LSTM / nn.Linear shapes."""
    k = 1.0 / jnp.sqrt(jnp.float32(hidden))
    keys = jax.random.split(key, 14)
    u = lambda kk, shape: jax.random.uniform(kk, shape, jnp.float32, -k, k)

    # PyTorch: weight_ih_l0 (4H,1); weight_ih_l{1,2} (4H,H); weight_hh_l* (4H,H)
    w_ih = [u(keys[0], (4 * hidden, 1)),
            u(keys[1], (4 * hidden, hidden)),
            u(keys[2], (4 * hidden, hidden))]
    w_hh = [u(keys[3 + l], (4 * hidden, hidden)) for l in range(NUM_LAYERS)]
    b_ih = [u(keys[6 + l], (4 * hidden,)) for l in range(NUM_LAYERS)]
    b_hh = [u(keys[9 + l], (4 * hidden,)) for l in range(NUM_LAYERS)]
    w_out = u(keys[12], (N_FEATURES, hidden))   # nn.Linear(hidden, 1).weight
    b_out = u(keys[13], (N_FEATURES,))          # nn.Linear(hidden, 1).bias
    return (w_ih, w_hh, b_ih, b_hh, w_out, b_out)


def pack_params(raw, hidden):
    """Transpose / fuse / pre-scale params for the kernel.

    The i/f/o gate columns of all weights and biases are scaled by 0.5 (exact
    in f32) so the kernel's single tanh realises sigmoid(x)=0.5*tanh(0.5x)+0.5
    without any per-step pre-scaling.
    """
    w_ih, w_hh, b_ih, b_hh, w_out, b_out = raw
    H = hidden
    scale = jnp.concatenate([jnp.full((H,), 0.5, jnp.float32),   # i
                             jnp.full((H,), 0.5, jnp.float32),   # f
                             jnp.ones((H,), jnp.float32),        # g
                             jnp.full((H,), 0.5, jnp.float32)])  # o

    wih0 = w_ih[0].T * scale                                         # (1, 4H)
    whh0 = w_hh[0].T * scale                                         # (H, 4H)
    wih12 = jnp.stack([w_ih[l].T * scale for l in (1, 2)])           # (2, H, 4H)
    whh12 = jnp.stack([w_hh[l].T * scale for l in (1, 2)])           # (2, H, 4H)
    b = jnp.stack([(b_ih[l] + b_hh[l]) * scale for l in range(NUM_LAYERS)])  # (3, 4H)
    wout = jnp.asarray(w_out, jnp.float32)                           # (1, H)
    bout = jnp.asarray(b_out, jnp.float32).reshape(1)                # (1,) -> SMEM
    return (wih0, whh0, wih12, whh12, b, wout, bout)


def decoder_reference(x, h0, c0, raw):
    """Pure-JAX reference: one PyTorch-style LSTM step (eval mode) + Linear,
    computed straight from the raw (unscaled, untransposed) parameters."""
    w_ih, w_hh, b_ih, b_hh, w_out, b_out = raw
    H = h0.shape[-1]
    inp = jnp.asarray(x, jnp.float32).reshape(1, 1)
    h = jnp.asarray(h0, jnp.float32).reshape(NUM_LAYERS, H)
    c = jnp.asarray(c0, jnp.float32).reshape(NUM_LAYERS, H)
    hn, cn = [], []
    for l in range(NUM_LAYERS):
        gates = inp @ w_ih[l].T + h[l:l + 1] @ w_hh[l].T + b_ih[l] + b_hh[l]
        i = jax.nn.sigmoid(gates[:, 0 * H:1 * H])
        f = jax.nn.sigmoid(gates[:, 1 * H:2 * H])
        g = jnp.tanh(gates[:, 2 * H:3 * H])
        o = jax.nn.sigmoid(gates[:, 3 * H:4 * H])
        c_new = f * c[l:l + 1] + i * g
        h_new = o * jnp.tanh(c_new)
        hn.append(h_new)
        cn.append(c_new)
        inp = h_new
    y = inp @ w_out.T + b_out
    return (y.reshape(1, 1, N_FEATURES),
            jnp.concatenate(hn, 0).reshape(NUM_LAYERS, 1, H),
            jnp.concatenate(cn, 0).reshape(NUM_LAYERS, 1, H))


if __name__ == "__main__":
    HIDDEN = 32     # == input_dim == hidden_dim of the Decoder
    SEQ_LEN = 8     # number of decode steps fused into one launch

    key = jax.random.PRNGKey(0)
    kp, kx, kh, kc = jax.random.split(key, 4)
    raw = init_raw_params(kp, HIDDEN)
    params = pack_params(raw, HIDDEN)

    xs = jax.random.normal(kx, (SEQ_LEN,), jnp.float32)
    input_hidden = jax.random.normal(kh, (NUM_LAYERS, 1, HIDDEN), jnp.float32)
    input_cell = jax.random.normal(kc, (NUM_LAYERS, 1, HIDDEN), jnp.float32)

    # --- single step: exactly the module's forward ---------------------------
    y1, hn1, cn1 = decoder_forward(xs[0], input_hidden, input_cell, params)
    jax.block_until_ready((y1, hn1, cn1))
    y1r, hn1r, cn1r = decoder_reference(xs[0], input_hidden, input_cell, raw)
    assert y1.shape == (1, 1, N_FEATURES)
    assert hn1.shape == (NUM_LAYERS, 1, HIDDEN) and cn1.shape == (NUM_LAYERS, 1, HIDDEN)
    assert jnp.allclose(y1, y1r, atol=1e-4)
    assert jnp.allclose(hn1, hn1r, atol=1e-4)
    assert jnp.allclose(cn1, cn1r, atol=1e-4)

    # --- T decode steps fused into one kernel launch --------------------------
    ys, hn, cn = decoder_step_seq(xs, input_hidden, input_cell, params)
    jax.block_until_ready((ys, hn, cn))

    h_r, c_r = input_hidden, input_cell
    ys_r = []
    for t in range(SEQ_LEN):
        y_r, h_r, c_r = decoder_reference(xs[t], h_r, c_r, raw)
        ys_r.append(y_r)
    ys_r = jnp.stack(ys_r)                     # (T, 1, 1, 1)

    assert ys.shape == (SEQ_LEN, 1, 1, N_FEATURES)
    assert jnp.allclose(ys, ys_r, atol=1e-4)
    assert jnp.allclose(hn, h_r, atol=1e-4)
    assert jnp.allclose(cn, c_r, atol=1e-4)

    print("KERNEL_OK")
</pallas_src>

<mosaic_0001>
module attributes {stable_mosaic.version = 11 : i64} {
  func.func @decoder_kernel(%arg0: memref<1xf32, #tpu.memory_space<smem>>, %arg1: memref<3x32xf32, #tpu.memory_space<vmem>>, %arg2: memref<3x32xf32, #tpu.memory_space<vmem>>, %arg3: memref<1x128xf32, #tpu.memory_space<vmem>>, %arg4: memref<32x128xf32, #tpu.memory_space<vmem>>, %arg5: memref<2x32x128xf32, #tpu.memory_space<vmem>>, %arg6: memref<2x32x128xf32, #tpu.memory_space<vmem>>, %arg7: memref<3x128xf32, #tpu.memory_space<vmem>>, %arg8: memref<1x32xf32, #tpu.memory_space<vmem>>, %arg9: memref<1xf32, #tpu.memory_space<smem>>, %arg10: memref<1x1xf32, #tpu.memory_space<vmem>>, %arg11: memref<3x32xf32, #tpu.memory_space<vmem>>, %arg12: memref<3x32xf32, #tpu.memory_space<vmem>>, %arg13: memref<1x32xf32, #tpu.memory_space<vmem>>) attributes {dimension_semantics = [], scalar_prefetch = 0 : i64, scratch_operands = 1 : i64, tpu.core_type = #tpu.core_type<tc>} {
    %0 = tpu.iota {dimensions = array<i32: 1>} : vector<1x128xi32>
    %c64_i32 = arith.constant 64 : i32
    %1 = vector.broadcast %c64_i32 : i32 to vector<1x128xi32>
    %2 = arith.cmpi sge, %0, %1 : vector<1x128xi32>
    %c96_i32 = arith.constant 96 : i32
    %3 = vector.broadcast %c96_i32 : i32 to vector<1x128xi32>
    %4 = arith.cmpi slt, %0, %3 : vector<1x128xi32>
    %5 = arith.andi %2, %4 : vector<1x128xi1>
    %cst = arith.constant 1.000000e+00 : f32
    %cst_0 = arith.constant 5.000000e-01 : f32
    %6 = vector.broadcast %cst : f32 to vector<1x128xf32>
    %7 = vector.broadcast %cst_0 : f32 to vector<1x128xf32>
    %8 = arith.select %5, %6, %7 : vector<1x128xi1>, vector<1x128xf32>
    %cst_1 = arith.constant 0.000000e+00 : f32
    %cst_2 = arith.constant 5.000000e-01 : f32
    %9 = vector.broadcast %cst_1 : f32 to vector<1x128xf32>
    %10 = vector.broadcast %cst_2 : f32 to vector<1x128xf32>
    %11 = arith.select %5, %9, %10 : vector<1x128xi1>, vector<1x128xf32>
    %c0 = arith.constant 0 : index
    %c0_3 = arith.constant 0 : index
    %12 = vector.load %arg3[%c0, %c0_3] : memref<1x128xf32, #tpu.memory_space<vmem>>, vector<1x128xf32>
    %c0_4 = arith.constant 0 : index
    %c0_5 = arith.constant 0 : index
    %13 = vector.load %arg4[%c0_4, %c0_5] : memref<32x128xf32, #tpu.memory_space<vmem>>, vector<32x128xf32>
    %c0_6 = arith.constant 0 : index
    %c0_7 = arith.constant 0 : index
    %c0_8 = arith.constant 0 : index
    %14 = vector.load %arg5[%c0_6, %c0_7, %c0_8] : memref<2x32x128xf32, #tpu.memory_space<vmem>>, vector<1x32x128xf32>
    %15 = vector.shape_cast %14 : vector<1x32x128xf32> to vector<32x128xf32>
    %c1 = arith.constant 1 : index
    %c0_9 = arith.constant 0 : index
    %c0_10 = arith.constant 0 : index
    %16 = vector.load %arg5[%c1, %c0_9, %c0_10] : memref<2x32x128xf32, #tpu.memory_space<vmem>>, vector<1x32x128xf32>
    %17 = vector.shape_cast %16 : vector<1x32x128xf32> to vector<32x128xf32>
    %c0_11 = arith.constant 0 : index
    %c0_12 = arith.constant 0 : index
    %c0_13 = arith.constant 0 : index
    %18 = vector.load %arg6[%c0_11, %c0_12, %c0_13] : memref<2x32x128xf32, #tpu.memory_space<vmem>>, vector<1x32x128xf32>
    %19 = vector.shape_cast %18 : vector<1x32x128xf32> to vector<32x128xf32>
    %c1_14 = arith.constant 1 : index
    %c0_15 = arith.constant 0 : index
    %c0_16 = arith.constant 0 : index
    %20 = vector.load %arg6[%c1_14, %c0_15, %c0_16] : memref<2x32x128xf32, #tpu.memory_space<vmem>>, vector<1x32x128xf32>
    %21 = vector.shape_cast %20 : vector<1x32x128xf32> to vector<32x128xf32>
    %c0_17 = arith.constant 0 : index
    %c0_18 = arith.constant 0 : index
    %22 = vector.load %arg7[%c0_17, %c0_18] : memref<3x128xf32, #tpu.memory_space<vmem>>, vector<1x128xf32>
    %c1_19 = arith.constant 1 : index
    %c0_20 = arith.constant 0 : index
    %23 = vector.load %arg7[%c1_19, %c0_20] : memref<3x128xf32, #tpu.memory_space<vmem>>, vector<1x128xf32>
    %c2 = arith.constant 2 : index
    %c0_21 = arith.constant 0 : index
    %24 = vector.load %arg7[%c2, %c0_21] : memref<3x128xf32, #tpu.memory_space<vmem>>, vector<1x128xf32>
    %c0_22 = arith.constant 0 : index
    %c0_23 = arith.constant 0 : index
    %25 = vector.load %arg8[%c0_22, %c0_23] : memref<1x32xf32, #tpu.memory_space<vmem>>, vector<1x32xf32>
    %c0_24 = arith.constant 0 : index
    %26 = memref.load %arg9[%c0_24] : memref<1xf32, #tpu.memory_space<smem>>
    %c0_25 = arith.constant 0 : index
    %c0_26 = arith.constant 0 : index
    %27 = vector.load %arg1[%c0_25, %c0_26] : memref<3x32xf32, #tpu.memory_space<vmem>>, vector<1x32xf32>
    %c1_27 = arith.constant 1 : index
    %c0_28 = arith.constant 0 : index
    %28 = vector.load %arg1[%c1_27, %c0_28] : memref<3x32xf32, #tpu.memory_space<vmem>>, vector<1x32xf32>
    %c2_29 = arith.constant 2 : index
    %c0_30 = arith.constant 0 : index
    %29 = vector.load %arg1[%c2_29, %c0_30] : memref<3x32xf32, #tpu.memory_space<vmem>>, vector<1x32xf32>
    %c0_31 = arith.constant 0 : index
    %c0_32 = arith.constant 0 : index
    %30 = vector.load %arg2[%c0_31, %c0_32] : memref<3x32xf32, #tpu.memory_space<vmem>>, vector<1x32xf32>
    %c1_33 = arith.constant 1 : index
    %c0_34 = arith.constant 0 : index
    %31 = vector.load %arg2[%c1_33, %c0_34] : memref<3x32xf32, #tpu.memory_space<vmem>>, vector<1x32xf32>
    %c2_35 = arith.constant 2 : index
    %c0_36 = arith.constant 0 : index
    %32 = vector.load %arg2[%c2_35, %c0_36] : memref<3x32xf32, #tpu.memory_space<vmem>>, vector<1x32xf32>
    %c0_37 = arith.constant 0 : index
    %33 = memref.load %arg0[%c0_37] : memref<1xf32, #tpu.memory_space<smem>>
    %34 = vector.broadcast %33 : f32 to vector<1x128xf32>
    %35 = arith.mulf %34, %12 : vector<1x128xf32>
    %cst_38 = arith.constant dense<0.000000e+00> : vector<1x128xf32>
    %36 = tpu.matmul %27, %13, %cst_38 {dimension_numbers = #tpu.dot_dimension_numbers<[1], [0], [0], [1], [0, 0, 1, 1], [], []>} : vector<1x32xf32>, vector<32x128xf32>, vector<1x128xf32> -> vector<1x128xf32>
    %37 = arith.addf %35, %36 : vector<1x128xf32>
    %38 = arith.addf %37, %22 : vector<1x128xf32>
    %39 = math.tanh %38 : vector<1x128xf32>
    %40 = arith.mulf %8, %39 : vector<1x128xf32>
    %41 = arith.addf %40, %11 : vector<1x128xf32>
    %42 = vector.extract_strided_slice %41 {offsets = [0, 0], sizes = [1, 32], strides = [1, 1]} : vector<1x128xf32> to vector<1x32xf32>
    %43 = vector.extract_strided_slice %41 {offsets = [0, 32], sizes = [1, 32], strides = [1, 1]} : vector<1x128xf32> to vector<1x32xf32>
    %44 = vector.extract_strided_slice %41 {offsets = [0, 64], sizes = [1, 32], strides = [1, 1]} : vector<1x128xf32> to vector<1x32xf32>
    %45 = vector.extract_strided_slice %41 {offsets = [0, 96], sizes = [1, 32], strides = [1, 1]} : vector<1x128xf32> to vector<1x32xf32>
    %46 = arith.mulf %43, %30 : vector<1x32xf32>
    %47 = arith.mulf %42, %44 : vector<1x32xf32>
    %48 = arith.addf %46, %47 : vector<1x32xf32>
    %49 = math.tanh %48 : vector<1x32xf32>
    %50 = arith.mulf %45, %49 : vector<1x32xf32>
    %cst_39 = arith.constant dense<0.000000e+00> : vector<1x128xf32>
    %51 = tpu.matmul %50, %15, %cst_39 {dimension_numbers = #tpu.dot_dimension_numbers<[1], [0], [0], [1], [0, 0, 1, 1], [], []>} : vector<1x32xf32>, vector<32x128xf32>, vector<1x128xf32> -> vector<1x128xf32>
    %cst_40 = arith.constant dense<0.000000e+00> : vector<1x128xf32>
    %52 = tpu.matmul %28, %19, %cst_40 {dimension_numbers = #tpu.dot_dimension_numbers<[1], [0], [0], [1], [0, 0, 1, 1], [], []>} : vector<1x32xf32>, vector<32x128xf32>, vector<1x128xf32> -> vector<1x128xf32>
    %53 = arith.addf %51, %52 : vector<1x128xf32>
    %54 = arith.addf %53, %23 : vector<1x128xf32>
    %55 = math.tanh %54 : vector<1x128xf32>
    %56 = arith.mulf %8, %55 : vector<1x128xf32>
    %57 = arith.addf %56, %11 : vector<1x128xf32>
    %58 = vector.extract_strided_slice %57 {offsets = [0, 0], sizes = [1, 32], strides = [1, 1]} : vector<1x128xf32> to vector<1x32xf32>
    %59 = vector.extract_strided_slice %57 {offsets = [0, 32], sizes = [1, 32], strides = [1, 1]} : vector<1x128xf32> to vector<1x32xf32>
    %60 = vector.extract_strided_slice %57 {offsets = [0, 64], sizes = [1, 32], strides = [1, 1]} : vector<1x128xf32> to vector<1x32xf32>
    %61 = vector.extract_strided_slice %57 {offsets = [0, 96], sizes = [1, 32], strides = [1, 1]} : vector<1x128xf32> to vector<1x32xf32>
    %62 = arith.mulf %59, %31 : vector<1x32xf32>
    %63 = arith.mulf %58, %60 : vector<1x32xf32>
    %64 = arith.addf %62, %63 : vector<1x32xf32>
    %65 = math.tanh %64 : vector<1x32xf32>
    %66 = arith.mulf %61, %65 : vector<1x32xf32>
    %cst_41 = arith.constant dense<0.000000e+00> : vector<1x128xf32>
    %67 = tpu.matmul %66, %17, %cst_41 {dimension_numbers = #tpu.dot_dimension_numbers<[1], [0], [0], [1], [0, 0, 1, 1], [], []>} : vector<1x32xf32>, vector<32x128xf32>, vector<1x128xf32> -> vector<1x128xf32>
    %cst_42 = arith.constant dense<0.000000e+00> : vector<1x128xf32>
    %68 = tpu.matmul %29, %21, %cst_42 {dimension_numbers = #tpu.dot_dimension_numbers<[1], [0], [0], [1], [0, 0, 1, 1], [], []>} : vector<1x32xf32>, vector<32x128xf32>, vector<1x128xf32> -> vector<1x128xf32>
    %69 = arith.addf %67, %68 : vector<1x128xf32>
    %70 = arith.addf %69, %24 : vector<1x128xf32>
    %71 = math.tanh %70 : vector<1x128xf32>
    %72 = arith.mulf %8, %71 : vector<1x128xf32>
    %73 = arith.addf %72, %11 : vector<1x128xf32>
    %74 = vector.extract_strided_slice %73 {offsets = [0, 0], sizes = [1, 32], strides = [1, 1]} : vector<1x128xf32> to vector<1x32xf32>
    %75 = vector.extract_strided_slice %73 {offsets = [0, 32], sizes = [1, 32], strides = [1, 1]} : vector<1x128xf32> to vector<1x32xf32>
    %76 = vector.extract_strided_slice %73 {offsets = [0, 64], sizes = [1, 32], strides = [1, 1]} : vector<1x128xf32> to vector<1x32xf32>
    %77 = vector.extract_strided_slice %73 {offsets = [0, 96], sizes = [1, 32], strides = [1, 1]} : vector<1x128xf32> to vector<1x32xf32>
    %78 = arith.mulf %75, %32 : vector<1x32xf32>
    %79 = arith.mulf %74, %76 : vector<1x32xf32>
    %80 = arith.addf %78, %79 : vector<1x32xf32>
    %81 = math.tanh %80 : vector<1x32xf32>
    %82 = arith.mulf %77, %81 : vector<1x32xf32>
    %c0_43 = arith.constant 0 : index
    %c0_44 = arith.constant 0 : index
    %83 = vector.load %arg13[%c0_43, %c0_44] : memref<1x32xf32, #tpu.memory_space<vmem>>, vector<1x32xf32>
    tpu.vector_store %arg13[%c0_43, %c0_44], %82 {strides = array<i32>} : memref<1x32xf32, #tpu.memory_space<vmem>>, vector<1x32xf32>,
    %c0_45 = arith.constant 0 : index
    %c0_46 = arith.constant 0 : index
    %84 = vector.load %arg13[%c0_45, %c0_46] : memref<1x32xf32, #tpu.memory_space<vmem>>, vector<1x32xf32>
    %85 = arith.mulf %84, %25 : vector<1x32xf32>
    %cst_47 = arith.constant dense<0.000000e+00> : vector<1xf32>
    %86 = vector.multi_reduction <add>, %85, %cst_47 [1] : vector<1x32xf32> to vector<1xf32>
    %87 = vector.shape_cast %86 : vector<1xf32> to vector<1x1xf32>
    %88 = vector.broadcast %26 : f32 to vector<1x1xf32>
    %89 = arith.addf %87, %88 : vector<1x1xf32>
    %c0_48 = arith.constant 0 : index
    %c0_49 = arith.constant 0 : index
    %90 = vector.load %arg10[%c0_48, %c0_49] : memref<1x1xf32, #tpu.memory_space<vmem>>, vector<1x1xf32>
    tpu.vector_store %arg10[%c0_48, %c0_49], %89 {strides = array<i32>} : memref<1x1xf32, #tpu.memory_space<vmem>>, vector<1x1xf32>,
    %c0_50 = arith.constant 0 : index
    %c0_51 = arith.constant 0 : index
    %91 = vector.load %arg11[%c0_50, %c0_51] : memref<3x32xf32, #tpu.memory_space<vmem>>, vector<1x32xf32>
    tpu.vector_store %arg11[%c0_50, %c0_51], %50 {strides = array<i32>} : memref<3x32xf32, #tpu.memory_space<vmem>>, vector<1x32xf32>,
    %c0_52 = arith.constant 0 : index
    %c0_53 = arith.constant 0 : index
    %92 = vector.load %arg12[%c0_52, %c0_53] : memref<3x32xf32, #tpu.memory_space<vmem>>, vector<1x32xf32>
    tpu.vector_store %arg12[%c0_52, %c0_53], %48 {strides = array<i32>} : memref<3x32xf32, #tpu.memory_space<vmem>>, vector<1x32xf32>,
    %c1_54 = arith.constant 1 : index
    %c0_55 = arith.constant 0 : index
    %93 = vector.load %arg11[%c1_54, %c0_55] : memref<3x32xf32, #tpu.memory_space<vmem>>, vector<1x32xf32>
    tpu.vector_store %arg11[%c1_54, %c0_55], %66 {strides = array<i32>} : memref<3x32xf32, #tpu.memory_space<vmem>>, vector<1x32xf32>,
    %c1_56 = arith.constant 1 : index
    %c0_57 = arith.constant 0 : index
    %94 = vector.load %arg12[%c1_56, %c0_57] : memref<3x32xf32, #tpu.memory_space<vmem>>, vector<1x32xf32>
    tpu.vector_store %arg12[%c1_56, %c0_57], %64 {strides = array<i32>} : memref<3x32xf32, #tpu.memory_space<vmem>>, vector<1x32xf32>,
    %c2_58 = arith.constant 2 : index
    %c0_59 = arith.constant 0 : index
    %95 = vector.load %arg11[%c2_58, %c0_59] : memref<3x32xf32, #tpu.memory_space<vmem>>, vector<1x32xf32>
    tpu.vector_store %arg11[%c2_58, %c0_59], %82 {strides = array<i32>} : memref<3x32xf32, #tpu.memory_space<vmem>>, vector<1x32xf32>,
    %c2_60 = arith.constant 2 : index
    %c0_61 = arith.constant 0 : index
    %96 = vector.load %arg12[%c2_60, %c0_61] : memref<3x32xf32, #tpu.memory_space<vmem>>, vector<1x32xf32>
    tpu.vector_store %arg12[%c2_60, %c0_61], %80 {strides = array<i32>} : memref<3x32xf32, #tpu.memory_space<vmem>>, vector<1x32xf32>,
    return
  }
}

</mosaic_0001>

<llo_original>
// kernel: _decoder_pallas.1
$region0: #{_decoder_pallas.1}
  #allocation0 [shape = 'u32[]', space=smem, size = 0x4, offset = 0x4, fixed_abs, tag = 'smem constant byte address 0x4 - core index']
  #allocation1 [shape = 'u32[144,128]{1,0:T(1,128)}', space=vmem, size = 0x12000, scoped, tag = 'internal scratch']
  #allocation2 [shape = 'f32[1,32]{1,0:T(1,128)}', space=vmem, size = 0x200, scoped, tag = 'scratch operand']
  #allocation3 [shape = 'f32[1]{0:T(128)S(6)}', space=smem, size = 0x200, scoped, tag = 'scoped memory for _decoder_pallas.1']
  #allocation4 [shape = 'f32[1]{0:T(128)S(6)}', space=smem, size = 0x200, scoped, tag = 'scoped memory for _decoder_pallas.1']
  %s0 = inlined_call_operand.<no memory space> [shape: f32[1], index: 0, kind: input, shape index: {}]
  %s1 = inlined_call_operand.vmem [shape: f32[3,32], index: 1, kind: input, shape index: {}]
  %s2 = inlined_call_operand.vmem [shape: f32[3,32], index: 2, kind: input, shape index: {}]
  %s3 = inlined_call_operand.vmem [shape: f32[1,128], index: 3, kind: input, shape index: {}]
  %s4 = inlined_call_operand.hbm [shape: f32[32,128], index: 4, kind: input, shape index: {}]
  %s5 = inlined_call_operand.hbm [shape: f32[2,32,128], index: 5, kind: input, shape index: {}]
  %s6 = inlined_call_operand.hbm [shape: f32[2,32,128], index: 6, kind: input, shape index: {}]
  %s7 = inlined_call_operand.vmem [shape: f32[3,128], index: 7, kind: input, shape index: {}]
  %s8 = inlined_call_operand.vmem [shape: f32[1,32], index: 8, kind: input, shape index: {}]
  %s9 = inlined_call_operand.<no memory space> [shape: f32[1], index: 9, kind: input, shape index: {}]
  %s10 = inlined_call_operand.hbm [shape: f32[1,1], index: 10, kind: output, shape index: {0}]
  %s11 = inlined_call_operand.hbm [shape: f32[3,32], index: 11, kind: output, shape index: {1}]
  %s12 = inlined_call_operand.hbm [shape: f32[3,32], index: 12, kind: output, shape index: {2}]
  %13 = xla_tuple %s10, %s11, %s12
  %s14 = sld [smem:[#allocation0]]
  $region78: #{_decoder_pallas.1} parent=0
    _
  %s16 = ssub.s32 1, %s14
  %s17 = scalar_select 0, %s16, %s14
  %18 = sst [smem:[#allocation3]] %s0
  %19 = sst [smem:[#allocation4]] %s9
  $region1: #{_decoder_pallas.1} parent=0
    #allocation5 [shape = 'u8[16384]{0}', space=vmem, size = 0x4000, scoped, tag = 'input window, operand 4, single buffered']
    #allocation6 [shape = 's32[1]{0}', space=sflag, size = 0x4, scoped, tag = 'scoped memory for _decoder_pallas.1']
    #allocation7 [shape = 's32[1]{0}', space=sflag, size = 0x4, scoped, tag = 'scoped memory for _decoder_pallas.1']
    #allocation8 [shape = 'u8[32768]{0}', space=vmem, size = 0x8000, scoped, tag = 'input window, operand 5, single buffered']
    #allocation9 [shape = 's32[1]{0}', space=sflag, size = 0x4, scoped, tag = 'scoped memory for _decoder_pallas.1']
    #allocation10 [shape = 'u8[32768]{0}', space=vmem, size = 0x8000, scoped, tag = 'input window, operand 6, single buffered']
    #allocation11 [shape = 'u8[512]{0}', space=vmem, size = 0x400, scoped, tag = 'output window, operand 0, single buffered']
    #allocation12 [shape = 'u8[2048]{0}', space=vmem, size = 0x800, scoped, tag = 'output window, operand 1, single buffered']
    #allocation13 [shape = 's32[1]{0}', space=sflag, size = 0x4, scoped, tag = 'scoped memory for _decoder_pallas.1']
    #allocation14 [shape = 'u8[2048]{0}', space=vmem, size = 0x800, scoped, tag = 'output window, operand 2, single buffered']
    %20 = vsyncpa [#allocation6], 0
    %21 = vsyncpa [#allocation9], 0
    %22 = vsyncpa [#allocation7], 0
    %23 = vsyncpa [#allocation13], 0
    // Predicated region
    $region2: #{_decoder_pallas.1} parent=1 // pred_check
      _
    $region3: #{_decoder_pallas.1} parent=1 // pred_check_branch
      %25 = sbr.rel (0) target = $region5
    $region4: #{_decoder_pallas.1} parent=1 // pred_region
      _
    $region5: #{_decoder_pallas.1} parent=1 // pred_fallthru
      _
    // Predicated region
    $region6: #{_decoder_pallas.1} parent=1 // pred_check
      _
    $region7: #{_decoder_pallas.1} parent=1 // pred_check_branch
      %27 = sbr.rel (0) target = $region9
    $region8: #{_decoder_pallas.1} parent=1 // pred_region
      _
    $region9: #{_decoder_pallas.1} parent=1 // pred_fallthru
      _
    // Predicated region
    $region10: #{_decoder_pallas.1} parent=1 // pred_check
      _
    $region11: #{_decoder_pallas.1} parent=1 // pred_check_branch
      %29 = sbr.rel (0) target = $region13
    $region12: #{_decoder_pallas.1} parent=1 // pred_region
      _
    $region13: #{_decoder_pallas.1} parent=1 // pred_fallthru
      _
    // Predicated region
    $region14: #{_decoder_pallas.1} parent=1 // pred_check
      _
    $region15: #{_decoder_pallas.1} parent=1 // pred_check_branch
      %31 = sbr.rel (0) target = $region17
    $region16: #{_decoder_pallas.1} parent=1 // pred_region
      _
    $region17: #{_decoder_pallas.1} parent=1 // pred_fallthru
      _
    // Predicated region
    $region18: #{_decoder_pallas.1} parent=1 // pred_check
      _
    $region19: #{_decoder_pallas.1} parent=1 // pred_check_branch
      %33 = sbr.rel (0) target = $region21
    $region20: #{_decoder_pallas.1} parent=1 // pred_region
      %s35 = ssub.s32 512, 512
      %36 = vsyncadd [#allocation6], %s35
      %s37 = sshll.u32 [#allocation5], 4
      %s38 = int_to_ptr.vmem [resolvable:$true] %s37
      %43 = dma.hbm_to_vmem [thread:$0]  %s4, 512, %s38, [#allocation6], 128, 128, 8
    $region21: #{_decoder_pallas.1} parent=1 // pred_fallthru
      _
    // Predicated region
    $region22: #{_decoder_pallas.1} parent=1 // pred_check
      _
    $region23: #{_decoder_pallas.1} parent=1 // pred_check_branch
      %45 = sbr.rel (0) target = $region25
    $region24: #{_decoder_pallas.1} parent=1 // pred_region
      %s47 = ssub.s32 1024, 1024
      %48 = vsyncadd [#allocation9], %s47
      %s49 = sshll.u32 [#allocation8], 4
      %s50 = int_to_ptr.vmem [resolvable:$true] %s49
      %55 = dma.hbm_to_vmem [thread:$0]  %s5, 1024, %s50, [#allocation9], 128, 128, 8
    $region25: #{_decoder_pallas.1} parent=1 // pred_fallthru
      _
    // Predicated region
    $region26: #{_decoder_pallas.1} parent=1 // pred_check
      _
    $region27: #{_decoder_pallas.1} parent=1 // pred_check_branch
      %57 = sbr.rel (0) target = $region29
    $region28: #{_decoder_pallas.1} parent=1 // pred_region
      %s59 = ssub.s32 1024, 1024
      %60 = vsyncadd [#allocation9], %s59
      %s61 = sshll.u32 [#allocation10], 4
      %s62 = int_to_ptr.vmem [resolvable:$true] %s61
      %67 = dma.hbm_to_vmem [thread:$0]  %s6, 1024, %s62, [#allocation9], 128, 128, 8
    $region29: #{_decoder_pallas.1} parent=1 // pred_fallthru
      _
    // Predicated region
    $region30: #{_decoder_pallas.1} parent=1 // pred_check
      _
    $region31: #{_decoder_pallas.1} parent=1 // pred_check_branch
      %69 = sbr.rel (0) target = $region33
    $region32: #{_decoder_pallas.1} parent=1 // pred_region
      _
    $region33: #{_decoder_pallas.1} parent=1 // pred_fallthru
      _
    // Predicated region
    $region34: #{_decoder_pallas.1} parent=1 // pred_check
      _
    $region35: #{_decoder_pallas.1} parent=1 // pred_check_branch
      %71 = sbr.rel (0) target = $region37
    $region36: #{_decoder_pallas.1} parent=1 // pred_region
      _
    $region37: #{_decoder_pallas.1} parent=1 // pred_fallthru
      _
    // Predicated region
    $region38: #{_decoder_pallas.1} parent=1 // pred_check
      _
    $region39: #{_decoder_pallas.1} parent=1 // pred_check_branch
      %73 = sbr.rel (0) target = $region41
    $region40: #{_decoder_pallas.1} parent=1 // pred_region
      _
    $region41: #{_decoder_pallas.1} parent=1 // pred_fallthru
      _
    // Predicated region
    $region42: #{_decoder_pallas.1} parent=1 // pred_check
      _
    $region43: #{_decoder_pallas.1} parent=1 // pred_check_branch
      %75 = sbr.rel (0) target = $region45
    $region44: #{_decoder_pallas.1} parent=1 // pred_region
      %76 = dma.done [#allocation6], 512
    $region45: #{_decoder_pallas.1} parent=1 // pred_fallthru
      _
    // Predicated region
    $region46: #{_decoder_pallas.1} parent=1 // pred_check
      _
    $region47: #{_decoder_pallas.1} parent=1 // pred_check_branch
      %78 = sbr.rel (0) target = $region49
    $region48: #{_decoder_pallas.1} parent=1 // pred_region
      %79 = dma.done [#allocation9], 1024
    $region49: #{_decoder_pallas.1} parent=1 // pred_fallthru
      _
    // Predicated region
    $region50: #{_decoder_pallas.1} parent=1 // pred_check
      _
    $region51: #{_decoder_pallas.1} parent=1 // pred_check_branch
      %81 = sbr.rel (0) target = $region53
    $region52: #{_decoder_pallas.1} parent=1 // pred_region
      %82 = dma.done [#allocation9], 1024
    $region53: #{_decoder_pallas.1} parent=1 // pred_fallthru
      _
    %v83 = vlaneseq
    %v84 = vand.u32 %v83, 127
    %vm85 = vcmp.ge.s32.totalorder %v84, 64
    %vm86 = vcmp.lt.s32.totalorder %v84, 96
    %vm87 = vmand %vm85, %vm86
    %v88 = vsel %vm87, 1.0, 0.5
    %v89 = vsel %vm87, 0.0, 0.5
    %v90 = vld [vmem:[%s3] sm:$0x1]
    %v91 = vld [vmem:[#allocation5] sm:$0xff]
    %v92 = vld [vmem:[#allocation5 + $0x8] sm:$0xff]
    %v93 = vld [vmem:[#allocation5 + $0x10] sm:$0xff]
    %v94 = vld [vmem:[#allocation5 + $0x18] sm:$0xff]
    %v95 = vld [vmem:[#allocation8] sm:$0xff]
    %v96 = vld [vmem:[#allocation8 + $0x8] sm:$0xff]
    %v97 = vld [vmem:[#allocation8 + $0x10] sm:$0xff]
    %v98 = vld [vmem:[#allocation8 + $0x18] sm:$0xff]
    %s99 = scalar_lea.vmem [#allocation8], 32
    %v100 = vld [vmem:[%s99] sm:$0xff]
    %v101 = vld [vmem:[%s99 + $0x8] sm:$0xff]
    %v102 = vld [vmem:[%s99 + $0x10] sm:$0xff]
    %v103 = vld [vmem:[%s99 + $0x18] sm:$0xff]
    %v104 = vld [vmem:[#allocation10] sm:$0xff]
    %v105 = vld [vmem:[#allocation10 + $0x8] sm:$0xff]
    %v106 = vld [vmem:[#allocation10 + $0x10] sm:$0xff]
    %v107 = vld [vmem:[#allocation10 + $0x18] sm:$0xff]
    %s108 = scalar_lea.vmem [#allocation10], 32
    %v109 = vld [vmem:[%s108] sm:$0xff]
    %v110 = vld [vmem:[%s108 + $0x8] sm:$0xff]
    %v111 = vld [vmem:[%s108 + $0x10] sm:$0xff]
    %v112 = vld [vmem:[%s108 + $0x18] sm:$0xff]
    %v113 = vld [vmem:[%s7] sm:$0x1]
    %v114 = vld [vmem:[%s7 + $0x1] sm:$0x1]
    %v115 = vld [vmem:[%s7 + $0x2] sm:$0x1]
    %v116 = vld [vmem:[%s8] sm:$0x1]
    %s117 = sld [smem:[#allocation4]]
    %v118 = vld [vmem:[%s1] sm:$0x1]
    %v119 = vld [vmem:[%s1 + $0x1] sm:$0x1]
    %v120 = vld [vmem:[%s1 + $0x2] sm:$0x1]
    %v121 = vld [vmem:[%s2] sm:$0x1]
    %v122 = vld [vmem:[%s2 + $0x1] sm:$0x1]
    %v123 = vld [vmem:[%s2 + $0x2] sm:$0x1]
    %s124 = sld [smem:[#allocation3]]
    %v125 = vstv %s124
    %v126 = vmul.f32 %v125, %v90
    %vm127 = vcmask 261120
    %v129 = vsel %vm127, %v118, 0
    %131 = vmatprep.subr.mxu0 0.0
    %132 = vmatpush1.msra.mxu0 %v91
    %133 = vmatprep.subr.mxu0 0.0
    %134 = vmatpush1.msra.mxu0 %v92
    %135 = vmatprep.subr.mxu0 0.0
    %136 = vmatpush1.msra.mxu0 %v93
    %137 = vmatprep.subr.mxu0 0.0
    %138 = vmatpush1.msra.mxu0 %v94
    %139 = vmatprep.subr.mxu0 0.0
    %140 = vmatpush1.msra.mxu0 0.0
    %141 = vmatprep.subr.mxu0 0.0
    %142 = vmatpush1.msra.mxu0 0.0
    %143 = vmatprep.subr.mxu0 0.0
    %144 = vmatpush1.msra.mxu0 0.0
    %145 = vmatprep.subr.mxu0 0.0
    %146 = vmatpush1.msra.mxu0 0.0
    %147 = vmatprep.subr.mxu0 0.0
    %148 = vmatpush1.msra.mxu0 0.0
    %149 = vmatprep.subr.mxu0 0.0
    %150 = vmatpush1.msra.mxu0 0.0
    %151 = vmatprep.subr.mxu0 0.0
    %152 = vmatpush1.msra.mxu0 0.0
    %153 = vmatprep.subr.mxu0 0.0
    %154 = vmatpush1.msra.mxu0 0.0
    %155 = vmatprep.subr.mxu0 0.0
    %156 = vmatpush1.msra.mxu0 0.0
    %157 = vmatprep.subr.mxu0 0.0
    %158 = vmatpush1.msra.mxu0 0.0
    %159 = vmatprep.subr.mxu0 0.0
    %160 = vmatpush1.msra.mxu0 0.0
    %161 = vmatprep.subr.mxu0 0.0
    %162 = vmatpush1.msra.mxu0 0.0
    %163 = vmatprep.subr.mxu0 0.0
    %164 = vmatpush1.msra.mxu0 0.0
    %165 = vmatprep.subr.mxu0 0.0
    %166 = vmatpush1.msra.mxu0 0.0
    %167 = vmatprep.subr.mxu0 0.0
    %168 = vmatpush1.msra.mxu0 0.0
    %169 = vmatprep.subr.mxu0 0.0
    %170 = vmatpush1.msra.mxu0 0.0
    %171 = vmatprep.subr.mxu0 0.0
    %172 = vmatpush1.msra.mxu0 0.0
    %173 = vmatprep.subr.mxu0 0.0
    %174 = vmatpush1.msra.mxu0 0.0
    %175 = vmatprep.subr.mxu0 0.0
    %176 = vmatpush1.msra.mxu0 0.0
    %177 = vmatprep.subr.mxu0 0.0
    %178 = vmatpush1.msra.mxu0 0.0
    %179 = vmatprep.subr.mxu0 0.0
    %180 = vmatpush1.msra.mxu0 0.0
    %181 = vmatprep.subr.mxu0 0.0
    %182 = vmatpush1.msra.mxu0 0.0
    %183 = vmatprep.subr.mxu0 0.0
    %184 = vmatpush1.msra.mxu0 0.0
    %185 = vmatprep.subr.mxu0 0.0
    %186 = vmatpush1.msra.mxu0 0.0
    %187 = vmatprep.subr.mxu0 0.0
    %188 = vmatpush1.msra.mxu0 0.0
    %189 = vmatprep.subr.mxu0 0.0
    %190 = vmatpush1.msra.mxu0 0.0
    %191 = vmatprep.subr.mxu0 0.0
    %192 = vmatpush1.msra.mxu0 0.0
    %193 = vmatprep.subr.mxu0 0.0
    %194 = vmatpush1.msra.mxu0 0.0
    %195 = vmatprep.mubr.f32.mxu0 0.0
    %196 = vmatmul.mubr.f32.gmra.mrb[0].mxu0 %v129
    %v197 = vpop.f32.mrb[0].mxu0
    %v198 = vadd.f32 0.0, %v197
    %v199 = vpop.f32.mrb[0].mxu0
    %200 = vdwg.mxu0
    %v201 = vadd.f32 %v126, %v198
    %v202 = vadd.f32 %v201, %v113
    %v203 = vtanh.pop %v202
    %v204 = vmul.f32 %v88, %v203
    %v205 = vadd.f32 %v204, %v89
    %207 = vrot.lane.b32.xlu0 %v121, 32
    %v208 = vpop.permute.xlu0 %207
    %v210 = vmul.f32 %v205, %v208
    %212 = vrot.lane.b32.xlu0 %v205, 64
    %v213 = vpop.permute.xlu0 %212
    %v215 = vmul.f32 %v205, %v213
    %217 = vrot.lane.b32.xlu0 %v215, 32
    %v218 = vpop.permute.xlu0 %217
    %v220 = vadd.f32 %v210, %v218
    %v221 = vtanh.pop %v220
    %223 = vrot.lane.b32.xlu0 %v221, 64
    %v224 = vpop.permute.xlu0 %223
    %v226 = vmul.f32 %v205, %v224
    %v228 = vsel %vm127, %v119, 0
    %230 = vmatprep.subr.mxu0 0.0
    %231 = vmatpush1.msra.mxu0 %v104
    %232 = vmatprep.subr.mxu0 0.0
    %233 = vmatpush1.msra.mxu0 %v105
    %234 = vmatprep.subr.mxu0 0.0
    %235 = vmatpush1.msra.mxu0 %v106
    %236 = vmatprep.subr.mxu0 0.0
    %237 = vmatpush1.msra.mxu0 %v107
    %238 = vmatprep.subr.mxu0 0.0
    %239 = vmatpush1.msra.mxu0 0.0
    %240 = vmatprep.subr.mxu0 0.0
    %241 = vmatpush1.msra.mxu0 0.0
    %242 = vmatprep.subr.mxu0 0.0
    %243 = vmatpush1.msra.mxu0 0.0
    %244 = vmatprep.subr.mxu0 0.0
    %245 = vmatpush1.msra.mxu0 0.0
    %246 = vmatprep.subr.mxu0 0.0
    %247 = vmatpush1.msra.mxu0 0.0
    %248 = vmatprep.subr.mxu0 0.0
    %249 = vmatpush1.msra.mxu0 0.0
    %250 = vmatprep.subr.mxu0 0.0
    %251 = vmatpush1.msra.mxu0 0.0
    %252 = vmatprep.subr.mxu0 0.0
    %253 = vmatpush1.msra.mxu0 0.0
    %254 = vmatprep.subr.mxu0 0.0
    %255 = vmatpush1.msra.mxu0 0.0
    %256 = vmatprep.subr.mxu0 0.0
    %257 = vmatpush1.msra.mxu0 0.0
    %258 = vmatprep.subr.mxu0 0.0
    %259 = vmatpush1.msra.mxu0 0.0
    %260 = vmatprep.subr.mxu0 0.0
    %261 = vmatpush1.msra.mxu0 0.0
    %262 = vmatprep.subr.mxu0 0.0
    %263 = vmatpush1.msra.mxu0 0.0
    %264 = vmatprep.subr.mxu0 0.0
    %265 = vmatpush1.msra.mxu0 0.0
    %266 = vmatprep.subr.mxu0 0.0
    %267 = vmatpush1.msra.mxu0 0.0
    %268 = vmatprep.subr.mxu0 0.0
    %269 = vmatpush1.msra.mxu0 0.0
    %270 = vmatprep.subr.mxu0 0.0
    %271 = vmatpush1.msra.mxu0 0.0
    %272 = vmatprep.subr.mxu0 0.0
    %273 = vmatpush1.msra.mxu0 0.0
    %274 = vmatprep.subr.mxu0 0.0
    %275 = vmatpush1.msra.mxu0 0.0
    %276 = vmatprep.subr.mxu0 0.0
    %277 = vmatpush1.msra.mxu0 0.0
    %278 = vmatprep.subr.mxu0 0.0
    %279 = vmatpush1.msra.mxu0 0.0
    %280 = vmatprep.subr.mxu0 0.0
    %281 = vmatpush1.msra.mxu0 0.0
    %282 = vmatprep.subr.mxu0 0.0
    %283 = vmatpush1.msra.mxu0 0.0
    %284 = vmatprep.subr.mxu0 0.0
    %285 = vmatpush1.msra.mxu0 0.0
    %286 = vmatprep.subr.mxu0 0.0
    %287 = vmatpush1.msra.mxu0 0.0
    %288 = vmatprep.subr.mxu0 0.0
    %289 = vmatpush1.msra.mxu0 0.0
    %290 = vmatprep.subr.mxu0 0.0
    %291 = vmatpush1.msra.mxu0 0.0
    %292 = vmatprep.subr.mxu0 0.0
    %293 = vmatpush1.msra.mxu0 0.0
    %294 = vmatprep.mubr.f32.mxu0 0.0
    %295 = vmatmul.mubr.f32.gmra.mrb[0].mxu0 %v228
    %v296 = vpop.f32.mrb[0].mxu0
    %v297 = vadd.f32 0.0, %v296
    %v298 = vpop.f32.mrb[0].mxu0
    %299 = vdwg.mxu0
    %301 = vrot.lane.b32.xlu0 %v226, 32
    %v302 = vpop.permute.xlu0 %301
    %v303 = vsel %vm127, %v302, 0
    %305 = vmatprep.subr.mxu0 0.0
    %306 = vmatpush1.msra.mxu0 %v95
    %307 = vmatprep.subr.mxu0 0.0
    %308 = vmatpush1.msra.mxu0 %v96
    %309 = vmatprep.subr.mxu0 0.0
    %310 = vmatpush1.msra.mxu0 %v97
    %311 = vmatprep.subr.mxu0 0.0
    %312 = vmatpush1.msra.mxu0 %v98
    %313 = vmatprep.subr.mxu0 0.0
    %314 = vmatpush1.msra.mxu0 0.0
    %315 = vmatprep.subr.mxu0 0.0
    %316 = vmatpush1.msra.mxu0 0.0
    %317 = vmatprep.subr.mxu0 0.0
    %318 = vmatpush1.msra.mxu0 0.0
    %319 = vmatprep.subr.mxu0 0.0
    %320 = vmatpush1.msra.mxu0 0.0
    %321 = vmatprep.subr.mxu0 0.0
    %322 = vmatpush1.msra.mxu0 0.0
    %323 = vmatprep.subr.mxu0 0.0
    %324 = vmatpush1.msra.mxu0 0.0
    %325 = vmatprep.subr.mxu0 0.0
    %326 = vmatpush1.msra.mxu0 0.0
    %327 = vmatprep.subr.mxu0 0.0
    %328 = vmatpush1.msra.mxu0 0.0
    %329 = vmatprep.subr.mxu0 0.0
    %330 = vmatpush1.msra.mxu0 0.0
    %331 = vmatprep.subr.mxu0 0.0
    %332 = vmatpush1.msra.mxu0 0.0
    %333 = vmatprep.subr.mxu0 0.0
    %334 = vmatpush1.msra.mxu0 0.0
    %335 = vmatprep.subr.mxu0 0.0
    %336 = vmatpush1.msra.mxu0 0.0
    %337 = vmatprep.subr.mxu0 0.0
    %338 = vmatpush1.msra.mxu0 0.0
    %339 = vmatprep.subr.mxu0 0.0
    %340 = vmatpush1.msra.mxu0 0.0
    %341 = vmatprep.subr.mxu0 0.0
    %342 = vmatpush1.msra.mxu0 0.0
    %343 = vmatprep.subr.mxu0 0.0
    %344 = vmatpush1.msra.mxu0 0.0
    %345 = vmatprep.subr.mxu0 0.0
    %346 = vmatpush1.msra.mxu0 0.0
    %347 = vmatprep.subr.mxu0 0.0
    %348 = vmatpush1.msra.mxu0 0.0
    %349 = vmatprep.subr.mxu0 0.0
    %350 = vmatpush1.msra.mxu0 0.0
    %351 = vmatprep.subr.mxu0 0.0
    %352 = vmatpush1.msra.mxu0 0.0
    %353 = vmatprep.subr.mxu0 0.0
    %354 = vmatpush1.msra.mxu0 0.0
    %355 = vmatprep.subr.mxu0 0.0
    %356 = vmatpush1.msra.mxu0 0.0
    %357 = vmatprep.subr.mxu0 0.0
    %358 = vmatpush1.msra.mxu0 0.0
    %359 = vmatprep.subr.mxu0 0.0
    %360 = vmatpush1.msra.mxu0 0.0
    %361 = vmatprep.subr.mxu0 0.0
    %362 = vmatpush1.msra.mxu0 0.0
    %363 = vmatprep.subr.mxu0 0.0
    %364 = vmatpush1.msra.mxu0 0.0
    %365 = vmatprep.subr.mxu0 0.0
    %366 = vmatpush1.msra.mxu0 0.0
    %367 = vmatprep.subr.mxu0 0.0
    %368 = vmatpush1.msra.mxu0 0.0
    %369 = vmatprep.mubr.f32.mxu0 0.0
    %370 = vmatmul.mubr.f32.gmra.mrb[0].mxu0 %v303
    %v371 = vpop.f32.mrb[0].mxu0
    %v372 = vadd.f32 %v297, %v371
    %v373 = vpop.f32.mrb[0].mxu0
    %374 = vdwg.mxu0
    %v375 = vadd.f32 %v372, %v114
    %v376 = vtanh.pop %v375
    %v377 = vmul.f32 %v88, %v376
    %v378 = vadd.f32 %v377, %v89
    %380 = vrot.lane.b32.xlu0 %v122, 32
    %v381 = vpop.permute.xlu0 %380
    %v383 = vmul.f32 %v378, %v381
    %385 = vrot.lane.b32.xlu0 %v378, 64
    %v386 = vpop.permute.xlu0 %385
    %v388 = vmul.f32 %v378, %v386
    %390 = vrot.lane.b32.xlu0 %v388, 32
    %v391 = vpop.permute.xlu0 %390
    %v393 = vadd.f32 %v383, %v391
    %v394 = vtanh.pop %v393
    %396 = vrot.lane.b32.xlu0 %v394, 64
    %v397 = vpop.permute.xlu0 %396
    %v399 = vmul.f32 %v378, %v397
    %v401 = vsel %vm127, %v120, 0
    %403 = vmatprep.subr.mxu0 0.0
    %404 = vmatpush1.msra.mxu0 %v109
    %405 = vmatprep.subr.mxu0 0.0
    %406 = vmatpush1.msra.mxu0 %v110
    %407 = vmatprep.subr.mxu0 0.0
    %408 = vmatpush1.msra.mxu0 %v111
    %409 = vmatprep.subr.mxu0 0.0
    %410 = vmatpush1.msra.mxu0 %v112
    %411 = vmatprep.subr.mxu0 0.0
    %412 = vmatpush1.msra.mxu0 0.0
    %413 = vmatprep.subr.mxu0 0.0
    %414 = vmatpush1.msra.mxu0 0.0
    %415 = vmatprep.subr.mxu0 0.0
    %416 = vmatpush1.msra.mxu0 0.0
    %417 = vmatprep.subr.mxu0 0.0
    %418 = vmatpush1.msra.mxu0 0.0
    %419 = vmatprep.subr.mxu0 0.0
    %420 = vmatpush1.msra.mxu0 0.0
    %421 = vmatprep.subr.mxu0 0.0
    %422 = vmatpush1.msra.mxu0 0.0
    %423 = vmatprep.subr.mxu0 0.0
    %424 = vmatpush1.msra.mxu0 0.0
    %425 = vmatprep.subr.mxu0 0.0
    %426 = vmatpush1.msra.mxu0 0.0
    %427 = vmatprep.subr.mxu0 0.0
    %428 = vmatpush1.msra.mxu0 0.0
    %429 = vmatprep.subr.mxu0 0.0
    %430 = vmatpush1.msra.mxu0 0.0
    %431 = vmatprep.subr.mxu0 0.0
    %432 = vmatpush1.msra.mxu0 0.0
    %433 = vmatprep.subr.mxu0 0.0
    %434 = vmatpush1.msra.mxu0 0.0
    %435 = vmatprep.subr.mxu0 0.0
    %436 = vmatpush1.msra.mxu0 0.0
    %437 = vmatprep.subr.mxu0 0.0
    %438 = vmatpush1.msra.mxu0 0.0
    %439 = vmatprep.subr.mxu0 0.0
    %440 = vmatpush1.msra.mxu0 0.0
    %441 = vmatprep.subr.mxu0 0.0
    %442 = vmatpush1.msra.mxu0 0.0
    %443 = vmatprep.subr.mxu0 0.0
    %444 = vmatpush1.msra.mxu0 0.0
    %445 = vmatprep.subr.mxu0 0.0
    %446 = vmatpush1.msra.mxu0 0.0
    %447 = vmatprep.subr.mxu0 0.0
    %448 = vmatpush1.msra.mxu0 0.0
    %449 = vmatprep.subr.mxu0 0.0
    %450 = vmatpush1.msra.mxu0 0.0
    %451 = vmatprep.subr.mxu0 0.0
    %452 = vmatpush1.msra.mxu0 0.0
    %453 = vmatprep.subr.mxu0 0.0
    %454 = vmatpush1.msra.mxu0 0.0
    %455 = vmatprep.subr.mxu0 0.0
    %456 = vmatpush1.msra.mxu0 0.0
    %457 = vmatprep.subr.mxu0 0.0
    %458 = vmatpush1.msra.mxu0 0.0
    %459 = vmatprep.subr.mxu0 0.0
    %460 = vmatpush1.msra.mxu0 0.0
    %461 = vmatprep.subr.mxu0 0.0
    %462 = vmatpush1.msra.mxu0 0.0
    %463 = vmatprep.subr.mxu0 0.0
    %464 = vmatpush1.msra.mxu0 0.0
    %465 = vmatprep.subr.mxu0 0.0
    %466 = vmatpush1.msra.mxu0 0.0
    %467 = vmatprep.mubr.f32.mxu0 0.0
    %468 = vmatmul.mubr.f32.gmra.mrb[0].mxu0 %v401
    %v469 = vpop.f32.mrb[0].mxu0
    %v470 = vadd.f32 0.0, %v469
    %v471 = vpop.f32.mrb[0].mxu0
    %472 = vdwg.mxu0
    %474 = vrot.lane.b32.xlu0 %v399, 32
    %v475 = vpop.permute.xlu0 %474
    %v476 = vsel %vm127, %v475, 0
    %478 = vmatprep.subr.mxu0 0.0
    %479 = vmatpush1.msra.mxu0 %v100
    %480 = vmatprep.subr.mxu0 0.0
    %481 = vmatpush1.msra.mxu0 %v101
    %482 = vmatprep.subr.mxu0 0.0
    %483 = vmatpush1.msra.mxu0 %v102
    %484 = vmatprep.subr.mxu0 0.0
    %485 = vmatpush1.msra.mxu0 %v103
    %486 = vmatprep.subr.mxu0 0.0
    %487 = vmatpush1.msra.mxu0 0.0
    %488 = vmatprep.subr.mxu0 0.0
    %489 = vmatpush1.msra.mxu0 0.0
    %490 = vmatprep.subr.mxu0 0.0
    %491 = vmatpush1.msra.mxu0 0.0
    %492 = vmatprep.subr.mxu0 0.0
    %493 = vmatpush1.msra.mxu0 0.0
    %494 = vmatprep.subr.mxu0 0.0
    %495 = vmatpush1.msra.mxu0 0.0
    %496 = vmatprep.subr.mxu0 0.0
    %497 = vmatpush1.msra.mxu0 0.0
    %498 = vmatprep.subr.mxu0 0.0
    %499 = vmatpush1.msra.mxu0 0.0
    %500 = vmatprep.subr.mxu0 0.0
    %501 = vmatpush1.msra.mxu0 0.0
    %502 = vmatprep.subr.mxu0 0.0
    %503 = vmatpush1.msra.mxu0 0.0
    %504 = vmatprep.subr.mxu0 0.0
    %505 = vmatpush1.msra.mxu0 0.0
    %506 = vmatprep.subr.mxu0 0.0
    %507 = vmatpush1.msra.mxu0 0.0
    %508 = vmatprep.subr.mxu0 0.0
    %509 = vmatpush1.msra.mxu0 0.0
    %510 = vmatprep.subr.mxu0 0.0
    %511 = vmatpush1.msra.mxu0 0.0
    %512 = vmatprep.subr.mxu0 0.0
    %513 = vmatpush1.msra.mxu0 0.0
    %514 = vmatprep.subr.mxu0 0.0
    %515 = vmatpush1.msra.mxu0 0.0
    %516 = vmatprep.subr.mxu0 0.0
    %517 = vmatpush1.msra.mxu0 0.0
    %518 = vmatprep.subr.mxu0 0.0
    %519 = vmatpush1.msra.mxu0 0.0
    %520 = vmatprep.subr.mxu0 0.0
    %521 = vmatpush1.msra.mxu0 0.0
    %522 = vmatprep.subr.mxu0 0.0
    %523 = vmatpush1.msra.mxu0 0.0
    %524 = vmatprep.subr.mxu0 0.0
    %525 = vmatpush1.msra.mxu0 0.0
    %526 = vmatprep.subr.mxu0 0.0
    %527 = vmatpush1.msra.mxu0 0.0
    %528 = vmatprep.subr.mxu0 0.0
    %529 = vmatpush1.msra.mxu0 0.0
    %530 = vmatprep.subr.mxu0 0.0
    %531 = vmatpush1.msra.mxu0 0.0
    %532 = vmatprep.subr.mxu0 0.0
    %533 = vmatpush1.msra.mxu0 0.0
    %534 = vmatprep.subr.mxu0 0.0
    %535 = vmatpush1.msra.mxu0 0.0
    %536 = vmatprep.subr.mxu0 0.0
    %537 = vmatpush1.msra.mxu0 0.0
    %538 = vmatprep.subr.mxu0 0.0
    %539 = vmatpush1.msra.mxu0 0.0
    %540 = vmatprep.subr.mxu0 0.0
    %541 = vmatpush1.msra.mxu0 0.0
    %542 = vmatprep.mubr.f32.mxu0 0.0
    %543 = vmatmul.mubr.f32.gmra.mrb[0].mxu0 %v476
    %v544 = vpop.f32.mrb[0].mxu0
    %v545 = vadd.f32 %v470, %v544
    %v546 = vpop.f32.mrb[0].mxu0
    %547 = vdwg.mxu0
    %v548 = vadd.f32 %v545, %v115
    %v549 = vtanh.pop %v548
    %v550 = vmul.f32 %v88, %v549
    %v551 = vadd.f32 %v550, %v89
    %553 = vrot.lane.b32.xlu0 %v123, 32
    %v554 = vpop.permute.xlu0 %553
    %v556 = vmul.f32 %v551, %v554
    %558 = vrot.lane.b32.xlu0 %v551, 64
    %v559 = vpop.permute.xlu0 %558
    %v561 = vmul.f32 %v551, %v559
    %563 = vrot.lane.b32.xlu0 %v561, 32
    %v564 = vpop.permute.xlu0 %563
    %v566 = vadd.f32 %v556, %v564
    %v567 = vtanh.pop %v566
    %569 = vrot.lane.b32.xlu0 %v567, 64
    %v570 = vpop.permute.xlu0 %569
    %v572 = vmul.f32 %v551, %v570
    %574 = vrot.lane.b32.xlu0 %v572, 32
    %v575 = vpop.permute.xlu0 %574
    %vm577 = vcmask 253952
    %578 = vst.msk [vmem:[#allocation2] sm:$0x1] %vm577, %v575
    %v579 = vld [vmem:[#allocation2] sm:$0x1]
    %v580 = vmul.f32 %v579, %v116
    %v581 = vsel %vm577, %v580, 0.0
    %582 = vadd.xlane.f32.xlu0 %v581
    %v583 = vpop.xlane.xlu0 %582
    %v584 = vstv %s117
    %v585 = vadd.f32 %v583, %v584
    %vm586 = vcmask 0
    %587 = vst.msk [vmem:[#allocation11] sm:$0x1] %vm586, %v585
    %589 = vst.msk [vmem:[#allocation12] sm:$0x1] %vm577, %v302
    %591 = vrot.lane.b32.xlu0 %v220, 96
    %v592 = vpop.permute.xlu0 %591
    %594 = vst.msk [vmem:[#allocation14] sm:$0x1] %vm577, %v592
    %596 = vst.msk [vmem:[#allocation12 + $0x1] sm:$0x1] %vm577, %v475
    %598 = vrot.lane.b32.xlu0 %v393, 96
    %v599 = vpop.permute.xlu0 %598
    %601 = vst.msk [vmem:[#allocation14 + $0x1] sm:$0x1] %vm577, %v599
    %602 = vst.msk [vmem:[#allocation12 + $0x2] sm:$0x1] %vm577, %v575
    %604 = vrot.lane.b32.xlu0 %v566, 96
    %v605 = vpop.permute.xlu0 %604
    %607 = vst.msk [vmem:[#allocation14 + $0x2] sm:$0x1] %vm577, %v605
    // Predicated region
    $region54: #{_decoder_pallas.1} parent=1 // pred_check
      _
    $region55: #{_decoder_pallas.1} parent=1 // pred_check_branch
      %609 = sbr.rel (0) target = $region57
    $region56: #{_decoder_pallas.1} parent=1 // pred_region
      %s611 = ssub.s32 16, 16
      %612 = vsyncadd [#allocation7], %s611
      %s614 = sshll.u32 [#allocation11], 4
      %s615 = int_to_ptr.vmem [resolvable:$true] %s614
      %617 = dma.vmem_to_hbm [thread:$0]  %s615, 16, %s10, [#allocation7]
    $region57: #{_decoder_pallas.1} parent=1 // pred_fallthru
      _
    // Predicated region
    $region58: #{_decoder_pallas.1} parent=1 // pred_check
      _
    $region59: #{_decoder_pallas.1} parent=1 // pred_check_branch
      %619 = sbr.rel (0) target = $region61
    $region60: #{_decoder_pallas.1} parent=1 // pred_region
      %s621 = ssub.s32 64, 64
      %622 = vsyncadd [#allocation13], %s621
      %s624 = sshll.u32 [#allocation12], 4
      %s625 = int_to_ptr.vmem [resolvable:$true] %s624
      %627 = dma.vmem_to_hbm [thread:$0]  %s625, 64, %s11, [#allocation13]
    $region61: #{_decoder_pallas.1} parent=1 // pred_fallthru
      _
    // Predicated region
    $region62: #{_decoder_pallas.1} parent=1 // pred_check
      _
    $region63: #{_decoder_pallas.1} parent=1 // pred_check_branch
      %629 = sbr.rel (0) target = $region65
    $region64: #{_decoder_pallas.1} parent=1 // pred_region
      %s631 = ssub.s32 64, 64
      %632 = vsyncadd [#allocation13], %s631
      %s634 = sshll.u32 [#allocation14], 4
      %s635 = int_to_ptr.vmem [resolvable:$true] %s634
      %637 = dma.vmem_to_hbm [thread:$0]  %s635, 64, %s12, [#allocation13]
    $region65: #{_decoder_pallas.1} parent=1 // pred_fallthru
      _
    // Predicated region
    $region66: #{_decoder_pallas.1} parent=1 // pred_check
      _
    $region67: #{_decoder_pallas.1} parent=1 // pred_check_branch
      %639 = sbr.rel (0) target = $region69
    $region68: #{_decoder_pallas.1} parent=1 // pred_region
      %640 = dma.done [#allocation7], 16
    $region69: #{_decoder_pallas.1} parent=1 // pred_fallthru
      _
    // Predicated region
    $region70: #{_decoder_pallas.1} parent=1 // pred_check
      _
    $region71: #{_decoder_pallas.1} parent=1 // pred_check_branch
      %642 = sbr.rel (0) target = $region73
    $region72: #{_decoder_pallas.1} parent=1 // pred_region
      %643 = dma.done [#allocation13], 64
    $region73: #{_decoder_pallas.1} parent=1 // pred_fallthru
      _
    // Predicated region
    $region74: #{_decoder_pallas.1} parent=1 // pred_check
      _
    $region75: #{_decoder_pallas.1} parent=1 // pred_check_branch
      %645 = sbr.rel (0) target = $region77
    $region76: #{_decoder_pallas.1} parent=1 // pred_region
      %646 = dma.done [#allocation13], 64
    $region77: #{_decoder_pallas.1} parent=1 // pred_fallthru
      _
    %647 = vsyncpa [#allocation6], 1
    %648 = vsyncpa [#allocation9], 1
    %649 = vsyncpa [#allocation7], 1
    %650 = vsyncpa [#allocation13], 1

</llo_original>
